<compile_context>
chip_gen: v6e
topology: v6e:2x2x1
jax: 0.10.0
libtpu: 0.0.40
codegen_flags: <defaults>
</compile_context>

<pallas_src>
import functools

import jax
import jax.numpy as jnp
from jax.experimental import pallas as pl
from jax.experimental.pallas import tpu as pltpu

VMEM_LIMIT = 48 * 1024 * 1024  # explicit budget; fits v7x's 64 MiB physical VMEM


def _rup(x, m):
    return (x + m - 1) // m * m


# -----------------------------------------------------------------------------
# Pallas kernels
# -----------------------------------------------------------------------------
def _mm_bias_kernel(a_ref, b_ref, bias_ref, o_ref):
    # bf16 x bf16 -> f32 MXU matmul with the bias add fused into the epilogue.
    o_ref[...] = (jnp.dot(a_ref[...], b_ref[...],
                          preferred_element_type=jnp.float32)
                  + bias_ref[...])


def _mm_bias_kloop_kernel(a_ref, b_ref, bias_ref, o_ref, acc_ref):
    # Fallback for large K: accumulate over a trailing k grid axis.
    @pl.when(pl.program_id(2) == 0)
    def _():
        acc_ref[...] = jnp.zeros_like(acc_ref)

    acc_ref[...] += jnp.dot(a_ref[...], b_ref[...],
                            preferred_element_type=jnp.float32)

    @pl.when(pl.program_id(2) == pl.num_programs(2) - 1)
    def _():
        o_ref[...] = acc_ref[...] + bias_ref[...]


def _affine_kernel(x_ref, s_ref, t_ref, o_ref, *, relu):
    y = x_ref[...] * s_ref[...] + t_ref[...]
    if relu:
        y = jnp.maximum(y, 0.0)
    o_ref[...] = y


def _crelu_affine_kernel(x_ref, s_ref, t_ref, o_ref, *, relu):
    # Fused CReLU + BN affine: out = [x*s1+t1 | x*s2+t2]; the "-x" sign of the
    # second half has already been folded into s2 by the wrapper.
    x = x_ref[...]
    cp = x.shape[1]
    y1 = x * s_ref[:, :cp] + t_ref[:, :cp]
    y2 = x * s_ref[:, cp:] + t_ref[:, cp:]
    if relu:
        y1 = jnp.maximum(y1, 0.0)
        y2 = jnp.maximum(y2, 0.0)
    o_ref[:, :cp] = y1
    o_ref[:, cp:] = y2


def _moments_kernel(x_ref, sum_ref, sq_ref):
    # One pass: per-channel sum and sum-of-squares, accumulated in the resident
    # output blocks across the (arbitrary) row-tile grid axis.
    @pl.when(pl.program_id(0) == 0)
    def _():
        sum_ref[...] = jnp.zeros_like(sum_ref)
        sq_ref[...] = jnp.zeros_like(sq_ref)

    x = x_ref[...]
    sum_ref[...] += jnp.sum(x, axis=0, keepdims=True)
    sq_ref[...] += jnp.sum(x * x, axis=0, keepdims=True)


# -----------------------------------------------------------------------------
# Pallas wrappers (jitted per shape; pads/slices fuse with the call)
# -----------------------------------------------------------------------------
@jax.jit
def matmul_bias(a, b, bias):
    """C = A @ B + bias.  A:(M,K), B:(K,N), bias:(N,).  bf16 MXU, f32 acc."""
    M, K = a.shape
    N = b.shape[1]
    TM = min(512, _rup(M, 128))
    Mp = _rup(M, TM)
    Np = _rup(N, 128)
    TN = 256 if Np % 256 == 0 else 128

    a_p = jnp.pad(a.astype(jnp.bfloat16), ((0, Mp - M), (0, 0)))
    b_p = jnp.pad(b.astype(jnp.bfloat16), ((0, 0), (0, Np - N)))
    bias_p = jnp.pad(bias.astype(jnp.float32).reshape(1, N),
                     ((0, 0), (0, Np - N)))

    if K <= 2048:
        # Single K block: no k grid axis, no accumulator scratch, no K padding.
        out = pl.pallas_call(
            _mm_bias_kernel,
            out_shape=jax.ShapeDtypeStruct((Mp, Np), jnp.float32),
            grid_spec=pltpu.PrefetchScalarGridSpec(
                num_scalar_prefetch=0,
                grid=(Mp // TM, Np // TN),
                in_specs=[pl.BlockSpec((TM, K), lambda i, j: (i, 0)),
                          pl.BlockSpec((K, TN), lambda i, j: (0, j)),
                          pl.BlockSpec((1, TN), lambda i, j: (0, j))],
                out_specs=pl.BlockSpec((TM, TN), lambda i, j: (i, j))),
            compiler_params=pltpu.CompilerParams(
                dimension_semantics=("parallel", "parallel"),
                vmem_limit_bytes=VMEM_LIMIT),
        )(a_p, b_p, bias_p)
    else:
        TK = 512
        Kp = _rup(K, TK)
        a_p = jnp.pad(a_p, ((0, 0), (0, Kp - K)))
        b_p = jnp.pad(b_p, ((0, Kp - K), (0, 0)))
        out = pl.pallas_call(
            _mm_bias_kloop_kernel,
            out_shape=jax.ShapeDtypeStruct((Mp, Np), jnp.float32),
            grid_spec=pltpu.PrefetchScalarGridSpec(
                num_scalar_prefetch=0,
                grid=(Mp // TM, Np // TN, Kp // TK),
                in_specs=[pl.BlockSpec((TM, TK), lambda i, j, k: (i, k)),
                          pl.BlockSpec((TK, TN), lambda i, j, k: (k, j)),
                          pl.BlockSpec((1, TN), lambda i, j, k: (0, j))],
                out_specs=pl.BlockSpec((TM, TN), lambda i, j, k: (i, j)),
                scratch_shapes=[pltpu.VMEM((TM, TN), jnp.float32)]),
            compiler_params=pltpu.CompilerParams(
                dimension_semantics=("parallel", "parallel", "arbitrary"),
                vmem_limit_bytes=VMEM_LIMIT),
        )(a_p, b_p, bias_p)
    return out[:M, :N]


def _row_tiles(M):
    tmr = min(512, _rup(M, 8))
    return tmr, _rup(M, tmr)


@functools.partial(jax.jit, static_argnames=("relu",))
def affine_act(x2d, scale, shift, *, relu):
    """y = x*scale + shift (+ ReLU), per channel, tiled & pipelined over rows."""
    M, C = x2d.shape
    Cp = _rup(C, 128)
    TMR, Mp = _row_tiles(M)
    x_p = jnp.pad(x2d.astype(jnp.float32), ((0, Mp - M), (0, Cp - C)))
    s_p = jnp.pad(scale.astype(jnp.float32).reshape(1, C), ((0, 0), (0, Cp - C)))
    t_p = jnp.pad(shift.astype(jnp.float32).reshape(1, C), ((0, 0), (0, Cp - C)))
    out = pl.pallas_call(
        functools.partial(_affine_kernel, relu=relu),
        out_shape=jax.ShapeDtypeStruct((Mp, Cp), jnp.float32),
        grid_spec=pltpu.PrefetchScalarGridSpec(
            num_scalar_prefetch=0,
            grid=(Mp // TMR,),
            in_specs=[pl.BlockSpec((TMR, Cp), lambda i: (i, 0)),
                      pl.BlockSpec((1, Cp), lambda i: (0, 0)),
                      pl.BlockSpec((1, Cp), lambda i: (0, 0))],
            out_specs=pl.BlockSpec((TMR, Cp), lambda i: (i, 0))),
        compiler_params=pltpu.CompilerParams(
            dimension_semantics=("parallel",),
            vmem_limit_bytes=VMEM_LIMIT),
    )(x_p, s_p, t_p)
    return out[:M, :C]


@functools.partial(jax.jit, static_argnames=("relu",))
def crelu_affine_act(x2d, scale2, shift2, *, relu):
    """Fused concat([x,-x]) + per-channel affine (+ ReLU).  scale2/shift2 have
    2*C entries; the sign for the negated half is already folded into scale2."""
    M, C = x2d.shape
    Cp = _rup(C, 128)
    TMR, Mp = _row_tiles(M)
    x_p = jnp.pad(x2d.astype(jnp.float32), ((0, Mp - M), (0, Cp - C)))

    def _pad_row(v):
        return jnp.pad(v.astype(jnp.float32).reshape(1, C), ((0, 0), (0, Cp - C)))

    s_p = jnp.concatenate([_pad_row(scale2[:C]), _pad_row(scale2[C:])], axis=1)
    t_p = jnp.concatenate([_pad_row(shift2[:C]), _pad_row(shift2[C:])], axis=1)
    out = pl.pallas_call(
        functools.partial(_crelu_affine_kernel, relu=relu),
        out_shape=jax.ShapeDtypeStruct((Mp, 2 * Cp), jnp.float32),
        grid_spec=pltpu.PrefetchScalarGridSpec(
            num_scalar_prefetch=0,
            grid=(Mp // TMR,),
            in_specs=[pl.BlockSpec((TMR, Cp), lambda i: (i, 0)),
                      pl.BlockSpec((1, 2 * Cp), lambda i: (0, 0)),
                      pl.BlockSpec((1, 2 * Cp), lambda i: (0, 0))],
            out_specs=pl.BlockSpec((TMR, 2 * Cp), lambda i: (i, 0))),
        compiler_params=pltpu.CompilerParams(
            dimension_semantics=("parallel",),
            vmem_limit_bytes=VMEM_LIMIT),
    )(x_p, s_p, t_p)
    return jnp.concatenate([out[:M, :C], out[:M, Cp:Cp + C]], axis=1)


@jax.jit
def channel_moments(x2d):
    """Per-channel (mean, biased var) over rows in one Pallas reduction pass."""
    M, C = x2d.shape
    Cp = _rup(C, 128)
    TMR, Mp = _row_tiles(M)
    x_p = jnp.pad(x2d.astype(jnp.float32), ((0, Mp - M), (0, Cp - C)))
    s, q = pl.pallas_call(
        _moments_kernel,
        out_shape=(jax.ShapeDtypeStruct((1, Cp), jnp.float32),
                   jax.ShapeDtypeStruct((1, Cp), jnp.float32)),
        grid_spec=pltpu.PrefetchScalarGridSpec(
            num_scalar_prefetch=0,
            grid=(Mp // TMR,),
            in_specs=[pl.BlockSpec((TMR, Cp), lambda i: (i, 0))],
            out_specs=(pl.BlockSpec((1, Cp), lambda i: (0, 0)),
                       pl.BlockSpec((1, Cp), lambda i: (0, 0)))),
        compiler_params=pltpu.CompilerParams(
            dimension_semantics=("arbitrary",),
            vmem_limit_bytes=VMEM_LIMIT),
    )(x_p)
    mean = s[0, :C] / M
    var = jnp.maximum(q[0, :C] / M - mean * mean, 0.0)  # biased var (PyTorch BN)
    return mean, var


# -----------------------------------------------------------------------------
# NN building blocks (glue in plain JAX, hot paths in Pallas)
# -----------------------------------------------------------------------------
def _im2col(x, kh, kw, stride, pad):
    """x: NHWC (bf16) -> (N*Ho*Wo, kh*kw*C) patches (tap order: kh, kw, C)."""
    # TODO(synk): fuse the kxk tap gather into the matmul's index_map (shifted
    # window reads) instead of materializing patches in HBM.
    N, H, W, C = x.shape
    xp = jnp.pad(x, ((0, 0), (pad, pad), (pad, pad), (0, 0)))
    Ho = (H + 2 * pad - kh) // stride + 1
    Wo = (W + 2 * pad - kw) // stride + 1
    cols = []
    for i in range(kh):
        for j in range(kw):
            cols.append(xp[:, i:i + stride * Ho:stride,
                           j:j + stride * Wo:stride, :])
    patches = jnp.concatenate(cols, axis=-1)
    return patches.reshape(N * Ho * Wo, kh * kw * C), (N, Ho, Wo)


def conv2d(x, w, b, stride, pad):
    """x: NHWC, w: (Cout, Cin, kh, kw) (PyTorch layout), b: (Cout,) or None."""
    Cout, Cin, kh, kw = w.shape
    if kh == 1 and kw == 1 and pad == 0:
        # 1x1 conv: (strided) reshape straight into the matmul, no im2col.
        if stride > 1:
            x = x[:, ::stride, ::stride, :]
        N, Ho, Wo, _ = x.shape
        a = x.reshape(N * Ho * Wo, Cin)
        w2 = jnp.transpose(w.reshape(Cout, Cin))
    else:
        a, (N, Ho, Wo) = _im2col(x.astype(jnp.bfloat16), kh, kw, stride, pad)
        w2 = jnp.transpose(w, (2, 3, 1, 0)).reshape(kh * kw * Cin, Cout)
    bias = b if b is not None else jnp.zeros((Cout,), jnp.float32)
    y = matmul_bias(a, w2, bias)
    return y.reshape(N, Ho, Wo, Cout)


def batchnorm_act(x, gamma, beta, relu, eps=1e-5):
    """Training-mode BatchNorm2d (batch stats) + optional ReLU."""
    N, H, W, C = x.shape
    x2 = x.reshape(-1, C)
    mean, var = channel_moments(x2)
    scale = gamma * jax.lax.rsqrt(var + eps)
    shift = beta - mean * scale
    return affine_act(x2, scale, shift, relu=relu).reshape(N, H, W, C)


def crelu_batchnorm_act(x, gamma, beta, relu, eps=1e-5):
    """BatchNorm2d(concat([x, -x])) (+ ReLU) without materializing the concat;
    statistics of the negated half follow analytically from those of x."""
    N, H, W, C = x.shape
    x2 = x.reshape(-1, C)
    mean, var = channel_moments(x2)
    inv = jax.lax.rsqrt(var + eps)
    s1 = gamma[:C] * inv
    t1 = beta[:C] - mean * s1
    s2_raw = gamma[C:] * inv           # mean of -x is -mean, var unchanged
    t2 = beta[C:] + mean * s2_raw
    scale2 = jnp.concatenate([s1, -s2_raw])
    shift2 = jnp.concatenate([t1, t2])
    y = crelu_affine_act(x2, scale2, shift2, relu=relu)
    return y.reshape(N, H, W, 2 * C)


def maxpool(x, k, stride, pad):
    # TODO(synk): max-pooling stays on lax.reduce_window (plain JAX), not Pallas.
    return jax.lax.reduce_window(
        x, jnp.array(-jnp.inf, dtype=x.dtype), jax.lax.max,
        window_dimensions=(1, k, k, 1),
        window_strides=(1, stride, stride, 1),
        padding=((0, 0), (pad, pad), (pad, pad), (0, 0)))


def _relu(x):
    return jnp.maximum(x, 0.0)


def _relu_bf16(x):
    # Pre-activation ReLU whose output only feeds convolutions: emit bf16 so
    # the downstream im2col / matmul A-operand traffic is half-width.
    return jnp.maximum(x, 0.0).astype(jnp.bfloat16)


def mcrelu_base(x, p, stride, ksize, preAct, lastAct):
    if preAct:
        x = _relu_bf16(x)
    x = conv2d(x, p['conv']['w'], p['conv']['b'], stride, ksize // 2)
    return crelu_batchnorm_act(x, p['bn']['g'], p['bn']['b'], relu=lastAct)


def mcrelu_residual(x, p, in_stride, ksize, preAct, lastAct, proj):
    x_sc = x
    if preAct:
        x = _relu_bf16(x)
    x = conv2d(x, p['reduce']['w'], p['reduce']['b'], in_stride, 0)
    x = _relu_bf16(x)
    x = conv2d(x, p['conv3x3']['w'], p['conv3x3']['b'], 1, ksize // 2)
    x = crelu_batchnorm_act(x, p['bn']['g'], p['bn']['b'], relu=True)
    x = conv2d(x, p['expand']['w'], p['expand']['b'], 1, 0)
    if lastAct:
        x = _relu(x)
    if proj:
        x_sc = conv2d(x_sc, p['proj']['w'], p['proj']['b'], in_stride, 0)
    return x + x_sc


def _conv_bn_relu(h, layer):
    h = conv2d(h, layer['w'], layer['b'], layer['stride'], layer['pad'])
    return batchnorm_act(h, layer['bn_g'], layer['bn_b'], relu=True)


def inception(x, p, in_stride, preAct, lastAct, proj):
    x_sc = x
    if preAct:
        x = _relu_bf16(x)
    branches = p['branches']
    outputs = [None] * len(branches)

    # Batch the 1x1 branch-head convs (same input, same stride, no bias) into
    # one matmul + one BN/ReLU pass, then split channels per branch.
    head_idx = [bi for bi, br in enumerate(branches)
                if br[0]['kind'] == 'conv' and br[0]['w'].shape[2] == 1
                and br[0]['b'] is None]
    if head_idx:
        w_cat = jnp.concatenate([branches[bi][0]['w'] for bi in head_idx], axis=0)
        g_cat = jnp.concatenate([branches[bi][0]['bn_g'] for bi in head_idx])
        b_cat = jnp.concatenate([branches[bi][0]['bn_b'] for bi in head_idx])
        stride0 = branches[head_idx[0]][0]['stride']
        h = conv2d(x, w_cat, None, stride0, 0)
        h = batchnorm_act(h, g_cat, b_cat, relu=True)
        off = 0
        for bi in head_idx:
            co = branches[bi][0]['w'].shape[0]
            hb = h[..., off:off + co]
            off += co
            for layer in branches[bi][1:]:
                hb = _conv_bn_relu(hb, layer)
            outputs[bi] = hb

    # Remaining branches (pool-conv branch).
    for bi, br in enumerate(branches):
        if outputs[bi] is not None:
            continue
        hb = x
        for layer in br:
            if layer['kind'] == 'maxpool':
                hb = maxpool(hb, 3, layer['stride'], 1)
            else:
                hb = _conv_bn_relu(hb, layer)
        outputs[bi] = hb

    x = jnp.concatenate(outputs, axis=-1)
    x = conv2d(x, p['last_conv']['w'], p['last_conv']['b'], 1, 0)
    x = batchnorm_act(x, p['last_bn']['g'], p['last_bn']['b'], relu=lastAct)
    if proj:
        x_sc = conv2d(x_sc, p['proj']['w'], p['proj']['b'], in_stride, 0)
    return x + x_sc


# -----------------------------------------------------------------------------
# Deterministic parameter construction (shapes follow PVANetFeat.__init__)
# -----------------------------------------------------------------------------
class ParamGen:
    def __init__(self, seed=0):
        self._key = jax.random.PRNGKey(seed)
        self._n = 0

    def take(self, shape, scale=0.1):
        self._n += 1
        k = jax.random.fold_in(self._key, self._n)
        return scale * jax.random.normal(k, shape, dtype=jnp.float32)


def _conv_p(pg, cout, cin, k, bias=True):
    return {'w': pg.take((cout, cin, k, k)),
            'b': pg.take((cout,), 0.05) if bias else None}


def _bn_p(c):
    return {'g': jnp.ones((c,), jnp.float32), 'b': jnp.zeros((c,), jnp.float32)}


def build_params(seed=0):
    pg = ParamGen(seed)
    P = {}
    # conv1: mCReLU_base(3, 16, kernel=7, stride=2) then MaxPool
    P['conv1'] = {'conv': _conv_p(pg, 16, 3, 7), 'bn': _bn_p(32)}

    def res_p(n_in, n_red, n3, n_out, proj):
        p = {'reduce': _conv_p(pg, n_red, n_in, 1),
             'conv3x3': _conv_p(pg, n3, n_red, 3),
             'bn': _bn_p(2 * n3),
             'expand': _conv_p(pg, n_out, 2 * n3, 1)}
        if proj:
            p['proj'] = _conv_p(pg, n_out, n_in, 1)
        return p

    P['conv2'] = [res_p(32, 24, 24, 64, True),
                  res_p(64, 24, 24, 64, False),
                  res_p(64, 24, 24, 64, False)]
    P['conv3'] = [res_p(64, 48, 48, 128, True)] + \
                 [res_p(128, 48, 48, 128, False) for _ in range(3)]

    def incep_p(n_in, n_out, conv_specs, poolconv, in_stride, proj):
        branches = []
        total = 0
        for kernels, chns in conv_specs:
            layers = []
            c_last = n_in
            for idx, (k, co) in enumerate(zip(kernels, chns)):
                stride = in_stride if idx == 0 else 1
                cp = _conv_p(pg, co, c_last, k, bias=False)
                layers.append({'kind': 'conv', 'w': cp['w'], 'b': None,
                               'stride': stride, 'pad': k // 2,
                               'bn_g': jnp.ones((co,), jnp.float32),
                               'bn_b': jnp.zeros((co,), jnp.float32)})
                c_last = co
            branches.append(layers)
            total += c_last
        if poolconv:
            co = 128
            cp = _conv_p(pg, co, n_in, 1, bias=True)
            branches.append([
                {'kind': 'maxpool', 'stride': in_stride},
                {'kind': 'conv', 'w': cp['w'], 'b': cp['b'],
                 'stride': 1, 'pad': 0,
                 'bn_g': jnp.ones((co,), jnp.float32),
                 'bn_b': jnp.zeros((co,), jnp.float32)}])
            total += co
        p = {'branches': branches,
             'last_conv': _conv_p(pg, n_out, total, 1),
             'last_bn': _bn_p(n_out)}
        if proj:
            p['proj'] = _conv_p(pg, n_out, n_in, 1)
        return p

    specA = [([1], [64]), ([1, 3], [48, 128]), ([1, 3, 3], [24, 48, 48])]
    specB = [([1], [64]), ([1, 3], [96, 192]), ([1, 3, 3], [32, 64, 64])]
    P['conv4'] = [incep_p(128, 256, specA, True, 2, True)] + \
                 [incep_p(256, 256, specA, False, 1, False) for _ in range(3)]
    P['conv5'] = [incep_p(256, 384, specB, True, 2, True)] + \
                 [incep_p(384, 384, specB, False, 1, False) for _ in range(3)]
    return P


# -----------------------------------------------------------------------------
# PVANetFeat forward
# -----------------------------------------------------------------------------
def pvanet_feat(x_nchw, P):
    x = jnp.transpose(x_nchw.astype(jnp.float32), (0, 2, 3, 1))  # -> NHWC
    # conv1: mCReLU_base(3,16,k=7,s=2, lastAct=False) + MaxPool(3, pad=1, s=2)
    x = mcrelu_base(x, P['conv1'], stride=2, ksize=7, preAct=False,
                    lastAct=False)
    x = maxpool(x, 3, 2, 1)
    # conv2
    for i, bp in enumerate(P['conv2']):
        x = mcrelu_residual(x, bp, in_stride=1, ksize=3, preAct=True,
                            lastAct=False, proj=(i == 0))
    # conv3
    for i, bp in enumerate(P['conv3']):
        x = mcrelu_residual(x, bp, in_stride=2 if i == 0 else 1, ksize=3,
                            preAct=True, lastAct=False, proj=(i == 0))
    # conv4 (InceptionA x4)
    for i, bp in enumerate(P['conv4']):
        x = inception(x, bp, in_stride=2 if i == 0 else 1, preAct=True,
                      lastAct=False, proj=(i == 0))
    # conv5 (InceptionB x4 + ReLU)
    for i, bp in enumerate(P['conv5']):
        x = inception(x, bp, in_stride=2 if i == 0 else 1, preAct=True,
                      lastAct=False, proj=(i == 0))
    x = _relu(x)
    return jnp.transpose(x, (0, 3, 1, 2))  # -> NCHW


if __name__ == "__main__":
    key = jax.random.PRNGKey(0)
    x = jax.random.normal(key, (2, 3, 16, 16), dtype=jnp.float32)
    params = build_params(seed=0)
    out = pvanet_feat(x, params)
    out = jax.block_until_ready(out)
    assert out.shape == (2, 384, 1, 1), out.shape
    assert bool(jnp.all(jnp.isfinite(out)))
    print("KERNEL_OK")
</pallas_src>

<mosaic_0001>
module attributes {stable_mosaic.version = 11 : i64} {
  func.func @_mm_bias_kernel(%arg0: i32, %arg1: i32, %arg2: memref<128x147xbf16, #tpu.memory_space<vmem>>, %arg3: memref<147x128xbf16, #tpu.memory_space<vmem>>, %arg4: memref<1x128xf32, #tpu.memory_space<vmem>>, %arg5: memref<128x128xf32, #tpu.memory_space<vmem>>) attributes {dimension_semantics = [#tpu.dimension_semantics<parallel>, #tpu.dimension_semantics<parallel>], iteration_bounds = array<i64: 1, 1>, scalar_prefetch = 0 : i64, scratch_operands = 0 : i64, tpu.core_type = #tpu.core_type<tc>, window_params = [{transform_indices = @transform_0, window_bounds = array<i64: 128, 147>}, {transform_indices = @transform_1, window_bounds = array<i64: 147, 128>}, {transform_indices = @transform_2, window_bounds = array<i64: 1, 128>}, {transform_indices = @transform_3, window_bounds = array<i64: 128, 128>}]} {
    %c0 = arith.constant 0 : index
    %c0_0 = arith.constant 0 : index
    %0 = vector.load %arg2[%c0, %c0_0] : memref<128x147xbf16, #tpu.memory_space<vmem>>, vector<128x147xbf16>
    %c0_1 = arith.constant 0 : index
    %c0_2 = arith.constant 0 : index
    %1 = vector.load %arg3[%c0_1, %c0_2] : memref<147x128xbf16, #tpu.memory_space<vmem>>, vector<147x128xbf16>
    %cst = arith.constant dense<0.000000e+00> : vector<128x128xf32>
    %2 = tpu.matmul %0, %1, %cst {dimension_numbers = #tpu.dot_dimension_numbers<[1], [0], [0], [1], [0, 0, 1, 1], [], []>} : vector<128x147xbf16>, vector<147x128xbf16>, vector<128x128xf32> -> vector<128x128xf32>
    %c0_3 = arith.constant 0 : index
    %c0_4 = arith.constant 0 : index
    %3 = vector.load %arg4[%c0_3, %c0_4] : memref<1x128xf32, #tpu.memory_space<vmem>>, vector<1x128xf32>
    %4 = vector.broadcast %3 : vector<1x128xf32> to vector<128x128xf32>
    %5 = arith.addf %2, %4 : vector<128x128xf32>
    %c0_5 = arith.constant 0 : index
    %c0_6 = arith.constant 0 : index
    %6 = vector.load %arg5[%c0_5, %c0_6] : memref<128x128xf32, #tpu.memory_space<vmem>>, vector<128x128xf32>
    tpu.vector_store %arg5[%c0_5, %c0_6], %5 {strides = array<i32>} : memref<128x128xf32, #tpu.memory_space<vmem>>, vector<128x128xf32>,
    return
  }
  func.func @transform_0(%arg0: i32, %arg1: i32) -> (i32, i32) {
    %c0_i32 = arith.constant 0 : i32
    %c0_i32_0 = arith.constant 0 : i32
    return %arg0, %c0_i32 : i32, i32
  }
  func.func @transform_1(%arg0: i32, %arg1: i32) -> (i32, i32) {
    %c0_i32 = arith.constant 0 : i32
    %c0_i32_0 = arith.constant 0 : i32
    return %c0_i32, %arg1 : i32, i32
  }
  func.func @transform_2(%arg0: i32, %arg1: i32) -> (i32, i32) {
    %c0_i32 = arith.constant 0 : i32
    %c0_i32_0 = arith.constant 0 : i32
    return %c0_i32, %arg1 : i32, i32
  }
  func.func @transform_3(%arg0: i32, %arg1: i32) -> (i32, i32) {
    %c0_i32 = arith.constant 0 : i32
    return %arg0, %arg1 : i32, i32
  }
}

</mosaic_0001>

<llo_original>
// kernel: matmul_bias.1
$region0: #{matmul_bias.1}
  #allocation0 [shape = 'u32[]', space=smem, size = 0x4, offset = 0x4, fixed_abs, tag = 'smem constant byte address 0x4 - core index']
  #allocation1 [shape = 'u32[144,128]{1,0:T(1,128)}', space=vmem, size = 0x12000, scoped, tag = 'internal scratch']
  %s0 = inlined_call_operand.vmem [shape: bf16[128,147], index: 0, kind: input, shape index: {}]
  %s1 = inlined_call_operand.vmem [shape: bf16[147,128], index: 1, kind: input, shape index: {}]
  %s2 = inlined_call_operand.vmem [shape: f32[1,128], index: 2, kind: input, shape index: {}]
  %s3 = inlined_call_operand.vmem [shape: f32[128,128], index: 3, kind: output, shape index: {}]
  %s4 = sld [smem:[#allocation0]]
  $region22: #{matmul_bias.1} parent=0
    _
  %s6 = ssub.s32 1, %s4
  %s7 = scalar_select 0, %s6, %s4
  // Predicated region
  $region2: #{matmul_bias.1} parent=0 // pred_check
    _
  $region3: #{matmul_bias.1} parent=0 // pred_check_branch
    %9 = sbr.rel (0) target = $region5
  $region4: #{matmul_bias.1} parent=0 // pred_region
    _
  $region5: #{matmul_bias.1} parent=0 // pred_fallthru
    _
  // Predicated region
  $region6: #{matmul_bias.1} parent=0 // pred_check
    _
  $region7: #{matmul_bias.1} parent=0 // pred_check_branch
    %11 = sbr.rel (0) target = $region9
  $region8: #{matmul_bias.1} parent=0 // pred_region
    _
  $region9: #{matmul_bias.1} parent=0 // pred_fallthru
    _
  // Predicated region
  $region10: #{matmul_bias.1} parent=0 // pred_check
    _
  $region11: #{matmul_bias.1} parent=0 // pred_check_branch
    %13 = sbr.rel (0) target = $region13
  $region12: #{matmul_bias.1} parent=0 // pred_region
    _
  $region13: #{matmul_bias.1} parent=0 // pred_fallthru
    _
  %v15 = vld [vmem:[%s0] sm:$0xff]
  %v16 = vld [vmem:[%s0 + $0x8] sm:$0xff]
  %v17 = vld [vmem:[%s0 + $0x10] sm:$0xff]
  %v18 = vld [vmem:[%s0 + $0x18] sm:$0xff]
  %v19 = vld [vmem:[%s0 + $0x20] sm:$0xff]
  %v20 = vld [vmem:[%s0 + $0x28] sm:$0xff]
  %v21 = vld [vmem:[%s0 + $0x30] sm:$0xff]
  %v22 = vld [vmem:[%s0 + $0x38] sm:$0xff]
  %v23 = vld [vmem:[%s0 + $0x40] sm:$0xff]
  %v24 = vld [vmem:[%s0 + $0x48] sm:$0xff]
  %v25 = vld [vmem:[%s0 + $0x50] sm:$0xff]
  %v26 = vld [vmem:[%s0 + $0x58] sm:$0xff]
  %v27 = vld [vmem:[%s0 + $0x60] sm:$0xff]
  %v28 = vld [vmem:[%s0 + $0x68] sm:$0xff]
  %v29 = vld [vmem:[%s0 + $0x70] sm:$0xff]
  %v30 = vld [vmem:[%s0 + $0x78] sm:$0xff]
  %v31 = vld [vmem:[%s1] sm:$0xf]
  %v32 = vld [vmem:[%s1 + $0x4] sm:$0xf]
  %v33 = vld [vmem:[%s1 + $0x8] sm:$0xf]
  %v34 = vld [vmem:[%s1 + $0xc] sm:$0xf]
  %v35 = vld [vmem:[%s1 + $0x10] sm:$0xf]
  %v36 = vld [vmem:[%s1 + $0x14] sm:$0xf]
  %v37 = vld [vmem:[%s1 + $0x18] sm:$0xf]
  %v38 = vld [vmem:[%s1 + $0x1c] sm:$0xf]
  %v39 = vld [vmem:[%s1 + $0x20] sm:$0xf]
  %v40 = vld [vmem:[%s1 + $0x24] sm:$0xf]
  %v41 = vld [vmem:[%s1 + $0x28] sm:$0xf]
  %v42 = vld [vmem:[%s1 + $0x2c] sm:$0xf]
  %v43 = vld [vmem:[%s1 + $0x30] sm:$0xf]
  %v44 = vld [vmem:[%s1 + $0x34] sm:$0xf]
  %v45 = vld [vmem:[%s1 + $0x38] sm:$0xf]
  %v46 = vld [vmem:[%s1 + $0x3c] sm:$0xf]
  %v47 = vld [vmem:[%s1 + $0x40] sm:$0xf]
  %v48 = vld [vmem:[%s1 + $0x44] sm:$0xf]
  %v49 = vld [vmem:[%s1 + $0x48] sm:$0x3]
  %v50 = vld [vmem:[%s2] sm:$0x1]
  %v52 = vlaneseq
  %v53 = vshrl.u32 %v52, 7
  %v54 = vsub.s32 0, %v53
  %v55 = vrot.slane %v50, %v54
  %v73 = vunpack.c.l.b16 %v15
  %v74 = vunpack.c.h.b16 %v15
  %v75 = vunpack.c.l.b16 %v16
  %v76 = vunpack.c.h.b16 %v16
  %v77 = vunpack.c.l.b16 %v17
  %v78 = vunpack.c.h.b16 %v17
  %v79 = vunpack.c.l.b16 %v18
  %v80 = vunpack.c.h.b16 %v18
  %v81 = vunpack.c.l.b16 %v19
  %v82 = vunpack.c.h.b16 %v19
  %v83 = vunpack.c.l.b16 %v20
  %v84 = vunpack.c.h.b16 %v20
  %v85 = vunpack.c.l.b16 %v21
  %v86 = vunpack.c.h.b16 %v21
  %v87 = vunpack.c.l.b16 %v22
  %v88 = vunpack.c.h.b16 %v22
  %v89 = vunpack.c.l.b16 %v23
  %v90 = vunpack.c.h.b16 %v23
  %v91 = vunpack.c.l.b16 %v24
  %v92 = vunpack.c.h.b16 %v24
  %v93 = vunpack.c.l.b16 %v25
  %v94 = vunpack.c.h.b16 %v25
  %v95 = vunpack.c.l.b16 %v26
  %v96 = vunpack.c.h.b16 %v26
  %v97 = vunpack.c.l.b16 %v27
  %v98 = vunpack.c.h.b16 %v27
  %v99 = vunpack.c.l.b16 %v28
  %v100 = vunpack.c.h.b16 %v28
  %v101 = vunpack.c.l.b16 %v29
  %v102 = vunpack.c.h.b16 %v29
  %v103 = vunpack.c.l.b16 %v30
  %v104 = vunpack.c.h.b16 %v30
  %v105 = vpack.c.b16 %v75, %v73
  %v106 = vpack.c.b16 %v76, %v74
  %v107 = vpack.c.b16 %v79, %v77
  %v108 = vpack.c.b16 %v80, %v78
  %v109 = vpack.c.b16 %v83, %v81
  %v110 = vpack.c.b16 %v84, %v82
  %v111 = vpack.c.b16 %v87, %v85
  %v112 = vpack.c.b16 %v88, %v86
  %v113 = vpack.c.b16 %v91, %v89
  %v114 = vpack.c.b16 %v92, %v90
  %v115 = vpack.c.b16 %v95, %v93
  %v116 = vpack.c.b16 %v96, %v94
  %v117 = vpack.c.b16 %v99, %v97
  %v118 = vpack.c.b16 %v100, %v98
  %v119 = vpack.c.b16 %v103, %v101
  %v120 = vpack.c.b16 %v104, %v102
  %v148 = vunpack.c.l.b16 %v31
  %v149 = vunpack.c.l.b16 %v32
  %v150 = vunpack.c.l.b16 %v33
  %v151 = vunpack.c.l.b16 %v34
  %v152 = vunpack.c.l.b16 %v35
  %v153 = vunpack.c.l.b16 %v36
  %v154 = vunpack.c.l.b16 %v37
  %v155 = vunpack.c.l.b16 %v38
  %v156 = vunpack.c.l.b16 %v39
  %v157 = vunpack.c.l.b16 %v40
  %v158 = vunpack.c.l.b16 %v41
  %v159 = vunpack.c.l.b16 %v42
  %v160 = vunpack.c.l.b16 %v43
  %v161 = vunpack.c.l.b16 %v44
  %v162 = vunpack.c.l.b16 %v45
  %v163 = vunpack.c.l.b16 %v46
  %v164 = vunpack.c.l.b16 %v47
  %v165 = vunpack.c.l.b16 %v48
  %v166 = vunpack.c.l.b16 %v49
  %v167 = vpack.c.b16 %v149, %v148
  %v168 = vpack.c.b16 %v151, %v150
  %v169 = vpack.c.b16 %v153, %v152
  %v170 = vpack.c.b16 %v155, %v154
  %v171 = vpack.c.b16 %v157, %v156
  %v172 = vpack.c.b16 %v159, %v158
  %v173 = vpack.c.b16 %v161, %v160
  %v174 = vpack.c.b16 %v163, %v162
  %v175 = vpack.c.b16 %v165, %v164
  %v176 = vpack.c.b16 %v166, %v166
  %vm186 = vcmask 154624
  %v188 = vsel %vm186, %v106, 0
  %v191 = vsel %vm186, %v108, 0
  %v194 = vsel %vm186, %v110, 0
  %v197 = vsel %vm186, %v112, 0
  %v200 = vsel %vm186, %v114, 0
  %v203 = vsel %vm186, %v116, 0
  %v206 = vsel %vm186, %v118, 0
  %v209 = vsel %vm186, %v120, 0
  %vm211 = vcmask 1040384
  %vm212 = vcmask 1041408
  %v213 = vsel %vm211, 4294967295, 65535
  %v214 = vsel %vm212, %v213, 0
  %v216 = vand.u32 %v176, %v214
  %218 = vmatprep.subr.bf16.mxu0 0
  %219 = vmatpush1.bf16.msra.mxu0 %v174
  %220 = vmatprep.subr.bf16.mxu0 0
  %221 = vmatpush1.bf16.msra.mxu0 %v173
  %222 = vmatprep.subr.bf16.mxu0 0
  %223 = vmatpush1.bf16.msra.mxu0 %v172
  %224 = vmatprep.subr.bf16.mxu0 0
  %225 = vmatpush1.bf16.msra.mxu0 %v171
  %226 = vmatprep.subr.bf16.mxu0 0
  %227 = vmatpush1.bf16.msra.mxu0 %v170
  %228 = vmatprep.subr.bf16.mxu0 0
  %229 = vmatpush1.bf16.msra.mxu0 %v169
  %230 = vmatprep.subr.bf16.mxu0 0
  %231 = vmatpush1.bf16.msra.mxu0 %v168
  %232 = vmatprep.subr.bf16.mxu0 0
  %233 = vmatpush1.bf16.msra.mxu0 %v167
  %234 = vmatprep.subr.bf16.mxu0 0
  %235 = vmatpush2.bf16.msra.mxu0 0
  %236 = vmatprep.subr.bf16.mxu0 0
  %237 = vmatpush2.bf16.msra.mxu0 0
  %238 = vmatprep.subr.bf16.mxu0 0
  %239 = vmatpush2.bf16.msra.mxu0 0
  %240 = vmatprep.subr.bf16.mxu0 0
  %241 = vmatpush2.bf16.msra.mxu0 0
  %242 = vmatprep.subr.bf16.mxu0 0
  %243 = vmatpush2.bf16.msra.mxu0 0
  %244 = vmatprep.subr.bf16.mxu0 0
  %245 = vmatpush2.bf16.msra.mxu0 0
  %246 = vmatprep.subr.bf16.mxu0 0
  %247 = vmatpush2.bf16.msra.mxu0 %v216
  %248 = vmatprep.subr.bf16.mxu0 0
  %249 = vmatpush2.bf16.msra.mxu0 %v175
  %250 = vmatprep.mubr.bf16.mxu0 %v188
  %251 = vmatmul.mubr.bf16.gmra.mxu0 %v105
  %v252 = vpop.f32.mrf.mxu0
  %v253 = vadd.f32 %v55, %v252
  %v254 = vpop.f32.mrf.mxu0
  %v255 = vpop.f32.mrf.mxu0
  %v256 = vadd.f32 %v55, %v255
  %v257 = vpop.f32.mrf.mxu0
  %258 = vmatprep.mubr.bf16.mxu0 %v191
  %259 = vmatmul.mubr.bf16.gmra.mxu0 %v107
  %v260 = vpop.f32.mrf.mxu0
  %v261 = vadd.f32 %v55, %v260
  %v262 = vpop.f32.mrf.mxu0
  %v263 = vpop.f32.mrf.mxu0
  %v264 = vadd.f32 %v55, %v263
  %v265 = vpop.f32.mrf.mxu0
  %266 = vmatprep.mubr.bf16.mxu0 %v194
  %267 = vmatmul.mubr.bf16.gmra.mxu0 %v109
  %v268 = vpop.f32.mrf.mxu0
  %v269 = vadd.f32 %v55, %v268
  %v270 = vpop.f32.mrf.mxu0
  %v271 = vpop.f32.mrf.mxu0
  %v272 = vadd.f32 %v55, %v271
  %v273 = vpop.f32.mrf.mxu0
  %274 = vmatprep.mubr.bf16.mxu0 %v197
  %275 = vmatmul.mubr.bf16.gmra.mxu0 %v111
  %v276 = vpop.f32.mrf.mxu0
  %v277 = vadd.f32 %v55, %v276
  %v278 = vpop.f32.mrf.mxu0
  %v279 = vpop.f32.mrf.mxu0
  %v280 = vadd.f32 %v55, %v279
  %v281 = vpop.f32.mrf.mxu0
  %282 = vmatprep.mubr.bf16.mxu0 %v200
  %283 = vmatmul.mubr.bf16.gmra.mxu0 %v113
  %v284 = vpop.f32.mrf.mxu0
  %v285 = vadd.f32 %v55, %v284
  %v286 = vpop.f32.mrf.mxu0
  %v287 = vpop.f32.mrf.mxu0
  %v288 = vadd.f32 %v55, %v287
  %v289 = vpop.f32.mrf.mxu0
  %290 = vmatprep.mubr.bf16.mxu0 %v203
  %291 = vmatmul.mubr.bf16.gmra.mxu0 %v115
  %v292 = vpop.f32.mrf.mxu0
  %v293 = vadd.f32 %v55, %v292
  %v294 = vpop.f32.mrf.mxu0
  %v295 = vpop.f32.mrf.mxu0
  %v296 = vadd.f32 %v55, %v295
  %v297 = vpop.f32.mrf.mxu0
  %298 = vmatprep.mubr.bf16.mxu0 %v206
  %299 = vmatmul.mubr.bf16.gmra.mxu0 %v117
  %v300 = vpop.f32.mrf.mxu0
  %v301 = vadd.f32 %v55, %v300
  %v302 = vpop.f32.mrf.mxu0
  %v303 = vpop.f32.mrf.mxu0
  %v304 = vadd.f32 %v55, %v303
  %v305 = vpop.f32.mrf.mxu0
  %306 = vmatprep.mubr.bf16.mxu0 %v209
  %307 = vmatmul.mubr.bf16.gmra.mxu0 %v119
  %v308 = vpop.f32.mrf.mxu0
  %v309 = vadd.f32 %v55, %v308
  %v310 = vpop.f32.mrf.mxu0
  %v311 = vpop.f32.mrf.mxu0
  %v312 = vadd.f32 %v55, %v311
  %v313 = vpop.f32.mrf.mxu0
  %314 = vdwg.mxu0
  %315 = vst [vmem:[%s3] sm:$0xff] %v253
  %316 = vst [vmem:[%s3 + $0x8] sm:$0xff] %v256
  %317 = vst [vmem:[%s3 + $0x10] sm:$0xff] %v261
  %318 = vst [vmem:[%s3 + $0x18] sm:$0xff] %v264
  %319 = vst [vmem:[%s3 + $0x20] sm:$0xff] %v269
  %320 = vst [vmem:[%s3 + $0x28] sm:$0xff] %v272
  %321 = vst [vmem:[%s3 + $0x30] sm:$0xff] %v277
  %322 = vst [vmem:[%s3 + $0x38] sm:$0xff] %v280
  %323 = vst [vmem:[%s3 + $0x40] sm:$0xff] %v285
  %324 = vst [vmem:[%s3 + $0x48] sm:$0xff] %v288
  %325 = vst [vmem:[%s3 + $0x50] sm:$0xff] %v293
  %326 = vst [vmem:[%s3 + $0x58] sm:$0xff] %v296
  %327 = vst [vmem:[%s3 + $0x60] sm:$0xff] %v301
  %328 = vst [vmem:[%s3 + $0x68] sm:$0xff] %v304
  %329 = vst [vmem:[%s3 + $0x70] sm:$0xff] %v309
  %330 = vst [vmem:[%s3 + $0x78] sm:$0xff] %v312
  // Predicated region
  $region14: #{matmul_bias.1} parent=0 // pred_check
    _
  $region15: #{matmul_bias.1} parent=0 // pred_check_branch
    %332 = sbr.rel (0) target = $region17
  $region16: #{matmul_bias.1} parent=0 // pred_region
    _
  $region17: #{matmul_bias.1} parent=0 // pred_fallthru
    _
  // Predicated region
  $region18: #{matmul_bias.1} parent=0 // pred_check
    _
  $region19: #{matmul_bias.1} parent=0 // pred_check_branch
    %334 = sbr.rel (0) target = $region21
  $region20: #{matmul_bias.1} parent=0 // pred_region
    _
  $region21: #{matmul_bias.1} parent=0 // pred_fallthru
    _

</llo_original>
